<compile_context>
chip_gen: v5e
topology: v5e:2x2
jax: 0.10.0
libtpu: 0.0.40
codegen_flags: <defaults>
</compile_context>

<pallas_src>
import jax
import jax.numpy as jnp
from jax.experimental import pallas as pl
from jax.experimental.pallas import tpu as pltpu

_MiB = 1 << 20


def _round_up(x: int, m: int) -> int:
    return ((x + m - 1) // m) * m


def _choose_block_m(M: int, preferred: int = 512) -> int:
    """Row-tile size: MXU/lane friendly, minimal padding, >=2 tiles when M allows
    (so the 'parallel' row axis feeds both TensorCores on megacore / v7x)."""
    M8 = _round_up(M, 8)
    if M8 <= 8:
        return M8
    if M8 <= 256:
        # Small / decode-like M: split into two sublane-aligned tiles.
        return _round_up(M8 // 2, 8)
    cands = []
    for bm in (512, 384, 256, 128):
        if bm > preferred:
            continue
        M_p = _round_up(M, bm)
        if M_p // bm >= 2:
            cands.append((M_p - M, -bm, bm))   # minimize padding, prefer larger bm
    if not cands:
        return min(preferred, _round_up(M, 128))
    cands.sort()
    return cands[0][2]


def _choose_block_ff(d_ff_p: int, cap: int) -> int:
    """Largest multiple of 128 <= cap that divides d_ff_p (no padded d_ff work)."""
    cap = min(cap, d_ff_p)
    bff = (cap // 128) * 128
    while d_ff_p % bff != 0:
        bff -= 128
    return bff


def _estimate_vmem(block_m, block_ff, d_model_p, d_ff_p, cdt, odt,
                   resident, single_step):
    v = 2 * block_m * d_model_p * cdt          # x tile, double-buffered
    v += 2 * block_m * d_model_p * odt         # out tile, double-buffered
    v += 2 * (d_ff_p + d_model_p) * 4          # biases (tiny)
    if resident:
        v += 2 * 2 * d_model_p * d_ff_p * cdt  # W1 + W2 resident (2 buffers each)
    else:
        v += 2 * 2 * d_model_p * block_ff * cdt  # W1/W2 chunks, double-buffered
    if not single_step:
        v += block_m * d_model_p * 4           # f32 accumulator scratch
    v += block_m * block_ff * 4                # f32 intermediate h
    return v


def _make_ffn_kernel(resident: bool, single_step: bool, block_ff: int):
    if single_step:
        # d_ff fits one chunk: no accumulator scratch, write output directly.
        def kernel(x_ref, w1_ref, b1_ref, w2_ref, b2_ref, o_ref):
            h = jnp.dot(x_ref[...], w1_ref[...],
                        preferred_element_type=jnp.float32)
            h = jnp.maximum(h + b1_ref[...], 0.0)
            # TODO(synk): training-mode dropout not implemented (identity = eval mode).
            out = jnp.dot(h.astype(w2_ref.dtype), w2_ref[...],
                          preferred_element_type=jnp.float32)
            o_ref[...] = (out + b2_ref[...]).astype(o_ref.dtype)
        return kernel

    def kernel(x_ref, w1_ref, b1_ref, w2_ref, b2_ref, o_ref, acc_ref):
        j = pl.program_id(1)
        off = pl.multiple_of(j * block_ff, block_ff)

        @pl.when(j == 0)
        def _():
            acc_ref[...] = jnp.zeros_like(acc_ref)

        if resident:
            # Weights live fully in VMEM; take the current d_ff chunk in-kernel.
            w1c = w1_ref[:, pl.ds(off, block_ff)]
            w2c = w2_ref[pl.ds(off, block_ff), :]
        else:
            w1c = w1_ref[...]
            w2c = w2_ref[...]
        b1c = b1_ref[:, pl.ds(off, block_ff)]

        h = jnp.dot(x_ref[...], w1c, preferred_element_type=jnp.float32)
        h = jnp.maximum(h + b1c, 0.0)
        # TODO(synk): training-mode dropout not implemented (identity = eval mode).
        acc_ref[...] += jnp.dot(h.astype(w2c.dtype), w2c,
                                preferred_element_type=jnp.float32)

        @pl.when(j == pl.num_programs(1) - 1)
        def _():
            o_ref[...] = (acc_ref[...] + b2_ref[...]).astype(o_ref.dtype)

    return kernel


def prepare_ffn_params(w1, b1, w2, b2, compute_dtype=jnp.bfloat16):
    """Cast + pad weights once (hoisted out of the per-call hot path).

    w1: (d_model, d_ff), b1: (d_ff,), w2: (d_ff, d_model), b2: (d_model,)
    (PyTorch nn.Linear weights stored transposed for row-major matmuls.)
    """
    d_model, d_ff = w1.shape
    d_model_p = _round_up(d_model, 128)
    d_ff_p = _round_up(d_ff, 128)

    w1_p = w1.astype(compute_dtype)
    w2_p = w2.astype(compute_dtype)
    if (d_model_p, d_ff_p) != (d_model, d_ff):
        w1_p = jnp.pad(w1_p, ((0, d_model_p - d_model), (0, d_ff_p - d_ff)))
        w2_p = jnp.pad(w2_p, ((0, d_ff_p - d_ff), (0, d_model_p - d_model)))
    b1_p = b1.astype(jnp.float32)
    b2_p = b2.astype(jnp.float32)
    if d_ff_p != d_ff:
        b1_p = jnp.pad(b1_p, (0, d_ff_p - d_ff))
    if d_model_p != d_model:
        b2_p = jnp.pad(b2_p, (0, d_model_p - d_model))

    return dict(w1=w1_p, b1=b1_p.reshape(1, d_ff_p), w2=w2_p,
                b2=b2_p.reshape(1, d_model_p), d_model=d_model, d_ff=d_ff,
                compute_dtype=compute_dtype)


def positionwise_ffn(x, params, *, block_m=512, weights_resident=None):
    """x: (batch, seq, d_model) -> (batch, seq, d_model). params from prepare_ffn_params."""
    B, S, d_model = x.shape
    assert d_model == params["d_model"]
    w1_p, b1_p, w2_p, b2_p = params["w1"], params["b1"], params["w2"], params["b2"]
    compute_dtype = params["compute_dtype"]
    d_model_p, d_ff_p = w1_p.shape
    out_dtype = x.dtype
    M = B * S

    cdt = jnp.dtype(compute_dtype).itemsize
    odt = jnp.dtype(out_dtype).itemsize

    # ---- tile / residency planning ----
    block_m = _choose_block_m(M, preferred=block_m)
    M_p = _round_up(M, block_m)
    grid_m = M_p // block_m

    def plan(resident):
        bff = _choose_block_ff(d_ff_p, cap=2048 if resident else 512)
        single = (bff == d_ff_p)
        vmem = _estimate_vmem(block_m, bff, d_model_p, d_ff_p, cdt, odt,
                              resident, single)
        return bff, single, vmem

    if weights_resident is None:
        # Resident if double-buffered W1+W2 stay well under a v7x-safe budget.
        resident = 2 * (2 * d_model_p * d_ff_p * cdt) <= 24 * _MiB
        block_ff, single_step, vmem_needed = plan(resident)
        if resident and vmem_needed > 40 * _MiB:
            resident = False
            block_ff, single_step, vmem_needed = plan(False)
    else:
        resident = bool(weights_resident)
        block_ff, single_step, vmem_needed = plan(resident)

    grid_ff = d_ff_p // block_ff
    grid = (grid_m, grid_ff)                 # d_ff (reduction) axis last
    vmem_limit = int(min(max(vmem_needed + 4 * _MiB, 16 * _MiB), 48 * _MiB))

    # ---- pad activations (zero padding is semantically neutral) ----
    x2d = x.reshape(M, d_model).astype(compute_dtype)
    if (M_p, d_model_p) != (M, d_model):
        x2d = jnp.pad(x2d, ((0, M_p - M), (0, d_model_p - d_model)))

    # ---- BlockSpecs ----
    if resident:
        w1_spec = pl.BlockSpec((d_model_p, d_ff_p), lambda i, j: (0, 0))
        w2_spec = pl.BlockSpec((d_ff_p, d_model_p), lambda i, j: (0, 0))
    else:
        w1_spec = pl.BlockSpec((d_model_p, block_ff), lambda i, j: (0, j))
        w2_spec = pl.BlockSpec((block_ff, d_model_p), lambda i, j: (j, 0))
    in_specs = [
        pl.BlockSpec((block_m, d_model_p), lambda i, j: (i, 0)),   # x rows
        w1_spec,
        pl.BlockSpec((1, d_ff_p), lambda i, j: (0, 0)),            # b1 (resident)
        w2_spec,
        pl.BlockSpec((1, d_model_p), lambda i, j: (0, 0)),         # b2
    ]
    out_spec = pl.BlockSpec((block_m, d_model_p), lambda i, j: (i, 0))
    scratch = [] if single_step else [pltpu.VMEM((block_m, d_model_p), jnp.float32)]

    # ---- cost estimate reflecting actual HBM traffic ----
    w_reads = 1 if resident else grid_m
    bytes_accessed = (M_p * d_model_p * cdt                       # x
                      + w_reads * 2 * d_model_p * d_ff_p * cdt    # W1 + W2
                      + (d_ff_p + d_model_p) * 4                  # biases
                      + M_p * d_model_p * odt)                    # out
    cost = pl.CostEstimate(flops=4 * M_p * d_model_p * d_ff_p,
                           transcendentals=0,
                           bytes_accessed=int(bytes_accessed))

    out2d = pl.pallas_call(
        _make_ffn_kernel(resident, single_step, block_ff),
        out_shape=jax.ShapeDtypeStruct((M_p, d_model_p), out_dtype),
        grid_spec=pltpu.PrefetchScalarGridSpec(
            num_scalar_prefetch=0,
            grid=grid,
            in_specs=in_specs,
            out_specs=out_spec,
            scratch_shapes=scratch,
        ),
        compiler_params=pltpu.CompilerParams(
            dimension_semantics=("parallel", "arbitrary"),
            vmem_limit_bytes=vmem_limit,
        ),
        cost_estimate=cost,
    )(x2d, w1_p, b1_p, w2_p, b2_p)

    return out2d[:M, :d_model].reshape(B, S, d_model)


def init_params(key, d_model, d_ff, dtype=jnp.float32):
    # Deterministic init mirroring nn.Linear shapes (weights stored transposed).
    k1, k2, k3, k4 = jax.random.split(key, 4)
    s1 = 1.0 / jnp.sqrt(d_model)
    s2 = 1.0 / jnp.sqrt(d_ff)
    w1 = jax.random.uniform(k1, (d_model, d_ff), dtype, -s1, s1)
    b1 = jax.random.uniform(k2, (d_ff,), dtype, -s1, s1)
    w2 = jax.random.uniform(k3, (d_ff, d_model), dtype, -s2, s2)
    b2 = jax.random.uniform(k4, (d_model,), dtype, -s2, s2)
    return w1, b1, w2, b2


def _ref_ffn(x, w1, b1, w2, b2, compute_dtype=jnp.bfloat16):
    # Reference with the same bf16 operand rounding and f32 accumulation.
    xb = x.astype(compute_dtype)
    h = jnp.dot(xb, w1.astype(compute_dtype), preferred_element_type=jnp.float32)
    h = jnp.maximum(h + b1.astype(jnp.float32), 0.0)
    out = jnp.dot(h.astype(compute_dtype), w2.astype(compute_dtype),
                  preferred_element_type=jnp.float32)
    return (out + b2.astype(jnp.float32)).astype(x.dtype)


def _run_case(key, batch, seq, d_model, d_ff, weights_resident=None):
    kx, kp = jax.random.split(key)
    x = jax.random.normal(kx, (batch, seq, d_model), jnp.float32)
    w1, b1, w2, b2 = init_params(kp, d_model, d_ff)
    params = prepare_ffn_params(w1, b1, w2, b2)
    out = positionwise_ffn(x, params, weights_resident=weights_resident)
    out = jax.block_until_ready(out)
    assert out.shape == (batch, seq, d_model)
    assert out.dtype == x.dtype
    ref = _ref_ffn(x, w1, b1, w2, b2)
    err = float(jnp.max(jnp.abs(out - ref)))
    assert jnp.allclose(out, ref, atol=1e-2, rtol=1e-2), err


if __name__ == "__main__":
    key = jax.random.PRNGKey(0)
    k1, k2, k3 = jax.random.split(key, 3)

    # 1) typical small shape: lane-aligned dims, resident weights, single d_ff step
    _run_case(k1, batch=2, seq=8, d_model=128, d_ff=512)
    # 2) unaligned dims + multi-chunk d_ff: exercises padding, two row tiles,
    #    resident-weight in-kernel slicing and the f32 accumulator path
    _run_case(k2, batch=3, seq=5, d_model=96, d_ff=4096)
    # 3) forced streaming fallback (chunked weight BlockSpecs, 2 d_ff steps)
    _run_case(k3, batch=2, seq=8, d_model=128, d_ff=1024, weights_resident=False)

    print("KERNEL_OK")
</pallas_src>

<mosaic_0001>
module attributes {stable_mosaic.version = 11 : i64} {
  func.func @kernel(%arg0: i32, %arg1: i32, %arg2: memref<8x128xbf16, #tpu.memory_space<vmem>>, %arg3: memref<128x512xbf16, #tpu.memory_space<vmem>>, %arg4: memref<1x512xf32, #tpu.memory_space<vmem>>, %arg5: memref<512x128xbf16, #tpu.memory_space<vmem>>, %arg6: memref<1x128xf32, #tpu.memory_space<vmem>>, %arg7: memref<8x128xf32, #tpu.memory_space<vmem>>) attributes {dimension_semantics = [#tpu.dimension_semantics<parallel>, #tpu.dimension_semantics<arbitrary>], iteration_bounds = array<i64: 2, 1>, scalar_prefetch = 0 : i64, scratch_operands = 0 : i64, tpu.core_type = #tpu.core_type<tc>, window_params = [{transform_indices = @transform_0, window_bounds = array<i64: 8, 128>}, {pipeline_mode = #tpu.pipeline_mode<synchronous>, transform_indices = @transform_1, window_bounds = array<i64: 128, 512>}, {pipeline_mode = #tpu.pipeline_mode<synchronous>, transform_indices = @transform_2, window_bounds = array<i64: 1, 512>}, {pipeline_mode = #tpu.pipeline_mode<synchronous>, transform_indices = @transform_3, window_bounds = array<i64: 512, 128>}, {pipeline_mode = #tpu.pipeline_mode<synchronous>, transform_indices = @transform_4, window_bounds = array<i64: 1, 128>}, {transform_indices = @transform_5, window_bounds = array<i64: 8, 128>}]} {
    %c0 = arith.constant 0 : index
    %c0_0 = arith.constant 0 : index
    %0 = vector.load %arg2[%c0, %c0_0] : memref<8x128xbf16, #tpu.memory_space<vmem>>, vector<8x128xbf16>
    %c0_1 = arith.constant 0 : index
    %c0_2 = arith.constant 0 : index
    %1 = vector.load %arg3[%c0_1, %c0_2] : memref<128x512xbf16, #tpu.memory_space<vmem>>, vector<128x512xbf16>
    %cst = arith.constant dense<0.000000e+00> : vector<8x512xf32>
    %2 = tpu.matmul %0, %1, %cst {dimension_numbers = #tpu.dot_dimension_numbers<[1], [0], [0], [1], [0, 0, 1, 1], [], []>} : vector<8x128xbf16>, vector<128x512xbf16>, vector<8x512xf32> -> vector<8x512xf32>
    %c0_3 = arith.constant 0 : index
    %c0_4 = arith.constant 0 : index
    %3 = vector.load %arg4[%c0_3, %c0_4] : memref<1x512xf32, #tpu.memory_space<vmem>>, vector<1x512xf32>
    %4 = vector.broadcast %3 : vector<1x512xf32> to vector<8x512xf32>
    %5 = arith.addf %2, %4 : vector<8x512xf32>
    %cst_5 = arith.constant 0.000000e+00 : f32
    %6 = vector.broadcast %cst_5 : f32 to vector<8x512xf32>
    %7 = arith.maximumf %5, %6 : vector<8x512xf32>
    %8 = arith.truncf %7 : vector<8x512xf32> to vector<8x512xbf16>
    %c0_6 = arith.constant 0 : index
    %c0_7 = arith.constant 0 : index
    %9 = vector.load %arg5[%c0_6, %c0_7] : memref<512x128xbf16, #tpu.memory_space<vmem>>, vector<512x128xbf16>
    %cst_8 = arith.constant dense<0.000000e+00> : vector<8x128xf32>
    %10 = tpu.matmul %8, %9, %cst_8 {dimension_numbers = #tpu.dot_dimension_numbers<[1], [0], [0], [1], [0, 0, 1, 1], [], []>} : vector<8x512xbf16>, vector<512x128xbf16>, vector<8x128xf32> -> vector<8x128xf32>
    %c0_9 = arith.constant 0 : index
    %c0_10 = arith.constant 0 : index
    %11 = vector.load %arg6[%c0_9, %c0_10] : memref<1x128xf32, #tpu.memory_space<vmem>>, vector<1x128xf32>
    %12 = vector.broadcast %11 : vector<1x128xf32> to vector<8x128xf32>
    %13 = arith.addf %10, %12 : vector<8x128xf32>
    %c0_11 = arith.constant 0 : index
    %c0_12 = arith.constant 0 : index
    %14 = vector.load %arg7[%c0_11, %c0_12] : memref<8x128xf32, #tpu.memory_space<vmem>>, vector<8x128xf32>
    tpu.vector_store %arg7[%c0_11, %c0_12], %13 {strides = array<i32>} : memref<8x128xf32, #tpu.memory_space<vmem>>, vector<8x128xf32>,
    return
  }
  func.func @transform_0(%arg0: i32, %arg1: i32) -> (i32, i32) {
    %c0_i32 = arith.constant 0 : i32
    %c0_i32_0 = arith.constant 0 : i32
    return %arg0, %c0_i32 : i32, i32
  }
  func.func @transform_1(%arg0: i32, %arg1: i32) -> (i32, i32) {
    %c0_i32 = arith.constant 0 : i32
    %c0_i32_0 = arith.constant 0 : i32
    %c0_i32_1 = arith.constant 0 : i32
    return %c0_i32, %c0_i32_0 : i32, i32
  }
  func.func @transform_2(%arg0: i32, %arg1: i32) -> (i32, i32) {
    %c0_i32 = arith.constant 0 : i32
    %c0_i32_0 = arith.constant 0 : i32
    %c0_i32_1 = arith.constant 0 : i32
    return %c0_i32, %c0_i32_0 : i32, i32
  }
  func.func @transform_3(%arg0: i32, %arg1: i32) -> (i32, i32) {
    %c0_i32 = arith.constant 0 : i32
    %c0_i32_0 = arith.constant 0 : i32
    %c0_i32_1 = arith.constant 0 : i32
    return %c0_i32, %c0_i32_0 : i32, i32
  }
  func.func @transform_4(%arg0: i32, %arg1: i32) -> (i32, i32) {
    %c0_i32 = arith.constant 0 : i32
    %c0_i32_0 = arith.constant 0 : i32
    %c0_i32_1 = arith.constant 0 : i32
    return %c0_i32, %c0_i32_0 : i32, i32
  }
  func.func @transform_5(%arg0: i32, %arg1: i32) -> (i32, i32) {
    %c0_i32 = arith.constant 0 : i32
    %c0_i32_0 = arith.constant 0 : i32
    return %arg0, %c0_i32 : i32, i32
  }
}

</mosaic_0001>

<llo_original>
// kernel: tpu_custom_call.1
$region0: #{tpu_custom_call.1}
  #allocation0 [shape = 'u32[]', space=smem, size = 0x4, offset = 0x4, fixed_abs, tag = 'smem constant byte address 0x4 - core index']
  #allocation1 [shape = 'u32[72,128]{1,0:T(1,128)}', space=vmem, size = 0x9000, scoped, tag = 'internal scratch']
  %s0 = inlined_call_operand.hbm [shape: bf16[16,128], index: 0, kind: input, shape index: {}]
  %s1 = inlined_call_operand.hbm [shape: bf16[128,512], index: 1, kind: input, shape index: {}]
  %s2 = inlined_call_operand.hbm [shape: f32[1,512], index: 2, kind: input, shape index: {}]
  %s3 = inlined_call_operand.hbm [shape: bf16[512,128], index: 3, kind: input, shape index: {}]
  %s4 = inlined_call_operand.vmem [shape: f32[1,128], index: 4, kind: input, shape index: {}]
  %s5 = inlined_call_operand.hbm [shape: f32[16,128], index: 5, kind: output, shape index: {}]
  %s6 = sld [smem:[#allocation0]]
  $region69: #{tpu_custom_call.1} parent=0
    _
  %s8 = ssub.s32 1, %s6
  %s9 = scalar_select 0, %s8, %s6
  $region1: #{tpu_custom_call.1} parent=0
    #allocation2 [shape = 'u8[4096]{0}', space=vmem, size = 0x1000, scoped, tag = 'input window, operand 0']
    #allocation3 [shape = 's32[2]{0}', space=sflag, size = 0x8, scoped, tag = 'scoped memory for tpu_custom_call.1']
    #allocation4 [shape = 's32[2]{0}', space=sflag, size = 0x8, scoped, tag = 'scoped memory for tpu_custom_call.1']
    #allocation5 [shape = 'u8[131072]{0}', space=vmem, size = 0x20000, scoped, tag = 'input window, operand 1, single buffered']
    #allocation6 [shape = 's32[1]{0}', space=sflag, size = 0x4, scoped, tag = 'scoped memory for tpu_custom_call.1']
    #allocation7 [shape = 'u8[2048]{0}', space=vmem, size = 0x800, scoped, tag = 'input window, operand 2, single buffered']
    #allocation8 [shape = 'u8[131072]{0}', space=vmem, size = 0x20000, scoped, tag = 'input window, operand 3, single buffered']
    #allocation9 [shape = 's32[1]{0}', space=sflag, size = 0x4, scoped, tag = 'scoped memory for tpu_custom_call.1']
    #allocation10 [shape = 'u8[8192]{0}', space=vmem, size = 0x2000, scoped, tag = 'output window, operand 0']
    %10 = vsyncpa [#allocation3], 0
    %s11 = scalar_lea.sflag [#allocation3], 1
    %12 = vsyncpa %s11, 0
    %13 = vsyncpa [#allocation6], 0
    %14 = vsyncpa [#allocation9], 0
    %15 = vsyncpa [#allocation4], 0
    %s16 = scalar_lea.sflag [#allocation4], 1
    %17 = vsyncpa %s16, 0
    loop: start=0, step=1, limit=4
    $region2: #{tpu_custom_call.1} parent=1 // loop_pre_header
      _
    $region3: #{tpu_custom_call.1} parent=1 // loop_header
      %s19 = sphi 0, %s23
      %p20 = scmp.ge.s32.totalorder %s19, 4
      %s26 = sphi 0, %s38
      %s27 = sphi 0, %s34
      %s28 = sphi 0, %s26
      %s29 = sphi 0, %s27
      %s30 = sphi 0, %s28
      %s31 = sphi 0, %s29
      %s41 = sphi 0, %s43
      %s44 = sphi 0, %s41
      %s45 = sphi 0, %s44
      %s61 = sphi 0, %s45
      %s65 = sphi 0, %s65
      %s67 = sphi 0, %s65
      %s68 = sphi 0, %s67
      %s82 = sphi 0, %s68
      %s86 = sphi 0, %s86
      %s88 = sphi 0, %s86
      %s89 = sphi 0, %s88
      %s103 = sphi 0, %s89
      %s107 = sphi 0, %s107
      %s109 = sphi 0, %s107
      %s110 = sphi 0, %s109
      %s124 = sphi 0, %s110
      %s128 = sphi 0, %s128
      %s130 = sphi 0, %s128
      %s131 = sphi 0, %s130
      %s145 = sphi 0, %s131
      %s151 = sphi 0, %s153
      %s154 = sphi 0, %s151
      %s155 = sphi 0, %s154
      %s171 = sphi 0, %s155
    $region4: #{tpu_custom_call.1} parent=1 // loop_header_branch
      %22 = sbr.rel (%p20) target = $region8
    $region5: #{tpu_custom_call.1} parent=1 // loop_body
      %s24 = ssub.s32 %s19, 1
      %s25 = ssub.s32 %s19, 2
      %s32 = sadd.s32 1, %s27
      %p33 = scmp.ge.s32.totalorder %s32, 1
      %s34 = scalar_select %p33, 0, %s32
      %s35 = sadd.s32 1, %s26
      %s36 = scalar_select %p33, %s35, %s26
      %p37 = scmp.ge.s32.totalorder %s36, 2
      %s38 = scalar_select %p37, 0, %s36
      %s39 = ssub.s32 %s26, %s38
      %p40 = scmp.eq.s32.totalorder %s39, 0
      %s42 = sadd.s32 %s41, 1
      %s43 = scalar_select %p40, %s41, %s42
      %p46 = pneg %p40
      %p47 = scmp.eq.s32.totalorder %s19, 1
      %p48 = por %p46, %p47
      %p49 = scmp.ne.s32.totalorder %s41, %s44
      %p50 = scmp.eq.s32.totalorder %s19, 0
      %p51 = por %p49, %p50
      %p52 = scmp.ne.s32.totalorder %s41, %s44
      %p53 = scmp.eq.s32.totalorder %s24, 1
      %p54 = por %p52, %p53
      %p55 = scmp.ne.s32.totalorder %s44, %s45
      %p56 = scmp.eq.s32.totalorder %s24, 0
      %p57 = por %p55, %p56
      %p58 = scmp.ne.s32.totalorder %s44, %s45
      %p59 = scmp.eq.s32.totalorder %s25, 1
      %p60 = por %p58, %p59
      %p62 = scmp.ne.s32.totalorder %s45, %s61
      %p63 = scmp.eq.s32.totalorder %s25, 0
      %p64 = por %p62, %p63
      %s66 = sadd.s32 %s65, 1
      %p69 = scmp.eq.s32.totalorder %s19, 1
      %p70 = scmp.ne.s32.totalorder %s65, %s67
      %p71 = scmp.eq.s32.totalorder %s19, 0
      %p72 = por %p70, %p71
      %p73 = scmp.ne.s32.totalorder %s65, %s67
      %p74 = scmp.eq.s32.totalorder %s24, 1
      %p75 = por %p73, %p74
      %p76 = scmp.ne.s32.totalorder %s67, %s68
      %p77 = scmp.eq.s32.totalorder %s24, 0
      %p78 = por %p76, %p77
      %p79 = scmp.ne.s32.totalorder %s67, %s68
      %p80 = scmp.eq.s32.totalorder %s25, 1
      %p81 = por %p79, %p80
      %p83 = scmp.ne.s32.totalorder %s68, %s82
      %p84 = scmp.eq.s32.totalorder %s25, 0
      %p85 = por %p83, %p84
      %s87 = sadd.s32 %s86, 1
      %p90 = scmp.eq.s32.totalorder %s19, 1
      %p91 = scmp.ne.s32.totalorder %s86, %s88
      %p92 = scmp.eq.s32.totalorder %s19, 0
      %p93 = por %p91, %p92
      %p94 = scmp.ne.s32.totalorder %s86, %s88
      %p95 = scmp.eq.s32.totalorder %s24, 1
      %p96 = por %p94, %p95
      %p97 = scmp.ne.s32.totalorder %s88, %s89
      %p98 = scmp.eq.s32.totalorder %s24, 0
      %p99 = por %p97, %p98
      %p100 = scmp.ne.s32.totalorder %s88, %s89
      %p101 = scmp.eq.s32.totalorder %s25, 1
      %p102 = por %p100, %p101
      %p104 = scmp.ne.s32.totalorder %s89, %s103
      %p105 = scmp.eq.s32.totalorder %s25, 0
      %p106 = por %p104, %p105
      %s108 = sadd.s32 %s107, 1
      %p111 = scmp.eq.s32.totalorder %s19, 1
      %p112 = scmp.ne.s32.totalorder %s107, %s109
      %p113 = scmp.eq.s32.totalorder %s19, 0
      %p114 = por %p112, %p113
      %p115 = scmp.ne.s32.totalorder %s107, %s109
      %p116 = scmp.eq.s32.totalorder %s24, 1
      %p117 = por %p115, %p116
      %p118 = scmp.ne.s32.totalorder %s109, %s110
      %p119 = scmp.eq.s32.totalorder %s24, 0
      %p120 = por %p118, %p119
      %p121 = scmp.ne.s32.totalorder %s109, %s110
      %p122 = scmp.eq.s32.totalorder %s25, 1
      %p123 = por %p121, %p122
      %p125 = scmp.ne.s32.totalorder %s110, %s124
      %p126 = scmp.eq.s32.totalorder %s25, 0
      %p127 = por %p125, %p126
      %s129 = sadd.s32 %s128, 1
      %p132 = scmp.eq.s32.totalorder %s19, 1
      %p133 = scmp.ne.s32.totalorder %s128, %s130
      %p134 = scmp.eq.s32.totalorder %s19, 0
      %p135 = por %p133, %p134
      %p136 = scmp.ne.s32.totalorder %s128, %s130
      %p137 = scmp.eq.s32.totalorder %s24, 1
      %p138 = por %p136, %p137
      %p139 = scmp.ne.s32.totalorder %s130, %s131
      %p140 = scmp.eq.s32.totalorder %s24, 0
      %p141 = por %p139, %p140
      %p142 = scmp.ne.s32.totalorder %s130, %s131
      %p143 = scmp.eq.s32.totalorder %s25, 1
      %p144 = por %p142, %p143
      %p146 = scmp.ne.s32.totalorder %s131, %s145
      %p147 = scmp.eq.s32.totalorder %s25, 0
      %p148 = por %p146, %p147
      %s149 = ssub.s32 %s26, %s38
      %p150 = scmp.eq.s32.totalorder %s149, 0
      %s152 = sadd.s32 %s151, 1
      %s153 = scalar_select %p150, %s151, %s152
      %p156 = pneg %p150
      %p157 = scmp.eq.s32.totalorder %s19, 1
      %p158 = por %p156, %p157
      %p159 = scmp.ne.s32.totalorder %s151, %s154
      %p160 = scmp.eq.s32.totalorder %s19, 0
      %p161 = por %p159, %p160
      %p162 = scmp.ne.s32.totalorder %s151, %s154
      %p163 = scmp.eq.s32.totalorder %s24, 1
      %p164 = por %p162, %p163
      %p165 = scmp.ne.s32.totalorder %s154, %s155
      %p166 = scmp.eq.s32.totalorder %s24, 0
      %p167 = por %p165, %p166
      %p168 = scmp.ne.s32.totalorder %s154, %s155
      %p169 = scmp.eq.s32.totalorder %s25, 1
      %p170 = por %p168, %p169
      %p172 = scmp.ne.s32.totalorder %s155, %s171
      %p173 = scmp.eq.s32.totalorder %s25, 0
      %p174 = por %p172, %p173
      %p175 = scmp.le.s32.totalorder 1, %s19
      %p176 = scmp.lt.s32.totalorder %s19, 3
      %p177 = pnand %p175, %p176
      %p178 = pneg %p177
      // Predicated region
      $region9: #{tpu_custom_call.1} parent=5 // pred_check
        _
      $region10: #{tpu_custom_call.1} parent=5 // pred_check_branch
        %180 = sbr.rel (%p177) target = $region12
      $region11: #{tpu_custom_call.1} parent=5 // pred_region
        %s181 = ssub.s32 %s19, 1
        // Predicated region
        $region13: #{tpu_custom_call.1} parent=11 // pred_check
          %p182 = pneg %p78
        $region14: #{tpu_custom_call.1} parent=11 // pred_check_branch
          %184 = sbr.rel (%p182) target = $region16
        $region15: #{tpu_custom_call.1} parent=11 // pred_region
          %186 = vsyncadd [#allocation6], 0
          %s187 = sshll.u32 %s1, 4
          %s188 = int_to_ptr.hbm [resolvable:$true] %s187
          %s189 = sshll.u32 [#allocation5], 4
          %s190 = int_to_ptr.vmem [resolvable:$true] %s189
          %195 = dma.hbm_to_vmem [thread:$0]  %s188, 4096, %s190, [#allocation6], 256, 256, 16
        $region16: #{tpu_custom_call.1} parent=11 // pred_fallthru
          _
        // Predicated region
        $region17: #{tpu_custom_call.1} parent=11 // pred_check
          %p196 = pneg %p99
        $region18: #{tpu_custom_call.1} parent=11 // pred_check_branch
          %198 = sbr.rel (%p196) target = $region20
        $region19: #{tpu_custom_call.1} parent=11 // pred_region
          %200 = vsyncadd [#allocation6], 0
          %s202 = sshll.u32 %s2, 4
          %s203 = int_to_ptr.hbm [resolvable:$true] %s202
          %s204 = sshll.u32 [#allocation7], 4
          %s205 = int_to_ptr.vmem [resolvable:$true] %s204
          %207 = dma.hbm_to_vmem [thread:$0]  %s203, 64, %s205, [#allocation6]
        $region20: #{tpu_custom_call.1} parent=11 // pred_fallthru
          _
        // Predicated region
        $region21: #{tpu_custom_call.1} parent=11 // pred_check
          %p208 = pneg %p120
        $region22: #{tpu_custom_call.1} parent=11 // pred_check_branch
          %210 = sbr.rel (%p208) target = $region24
        $region23: #{tpu_custom_call.1} parent=11 // pred_region
          %212 = vsyncadd [#allocation9], 0
          %s213 = sshll.u32 %s3, 4
          %s214 = int_to_ptr.hbm [resolvable:$true] %s213
          %s215 = sshll.u32 [#allocation8], 4
          %s216 = int_to_ptr.vmem [resolvable:$true] %s215
          %221 = dma.hbm_to_vmem [thread:$0]  %s214, 4096, %s216, [#allocation9], 64, 64, 4
        $region24: #{tpu_custom_call.1} parent=11 // pred_fallthru
          _
        // Predicated region
        $region25: #{tpu_custom_call.1} parent=11 // pred_check
          %p222 = pneg %p141
        $region26: #{tpu_custom_call.1} parent=11 // pred_check_branch
          %224 = sbr.rel (%p222) target = $region28
        $region27: #{tpu_custom_call.1} parent=11 // pred_region
          _
        $region28: #{tpu_custom_call.1} parent=11 // pred_fallthru
          _
      $region12: #{tpu_custom_call.1} parent=5 // pred_fallthru
        _
      %p225 = scmp.lt.s32.totalorder %s19, 2
      // Predicated region
      $region29: #{tpu_custom_call.1} parent=5 // pred_check
        %p226 = pneg %p225
      $region30: #{tpu_custom_call.1} parent=5 // pred_check_branch
        %228 = sbr.rel (%p226) target = $region32
      $region31: #{tpu_custom_call.1} parent=5 // pred_region
        // Predicated region
        $region33: #{tpu_custom_call.1} parent=31 // pred_check
          %p229 = pneg %p51
        $region34: #{tpu_custom_call.1} parent=31 // pred_check_branch
          %231 = sbr.rel (%p229) target = $region36
        $region35: #{tpu_custom_call.1} parent=31 // pred_region
          %s232 = sand.u32 %s41, 1
          %s233 = scalar_lea.sflag [#allocation3], %s232
          %s234 = sand.u32 %s41, 1
          %s235 = smul.addr %s234, 4
          %s236 = scalar_lea.vmem [#allocation2], %s235
          %238 = vsyncadd %s233, 0
          %s239 = smul.addr %s26, 4
          %s240 = scalar_lea.hbm %s0, %s239
          %s242 = sshll.u32 %s240, 4
          %s243 = int_to_ptr.hbm [resolvable:$true] %s242
          %s244 = sshll.u32 %s236, 4
          %s245 = int_to_ptr.vmem [resolvable:$true] %s244
          %247 = dma.hbm_to_vmem [thread:$0]  %s243, 64, %s245, %s233
        $region36: #{tpu_custom_call.1} parent=31 // pred_fallthru
          _
      $region32: #{tpu_custom_call.1} parent=5 // pred_fallthru
        _
      %p248 = scmp.le.s32.totalorder 1, %s19
      %p249 = scmp.lt.s32.totalorder %s19, 3
      %p250 = pnand %p248, %p249
      %p251 = pneg %p250
      // Predicated region
      $region37: #{tpu_custom_call.1} parent=5 // pred_check
        _
      $region38: #{tpu_custom_call.1} parent=5 // pred_check_branch
        %253 = sbr.rel (%p250) target = $region40
      $region39: #{tpu_custom_call.1} parent=5 // pred_region
        %s254 = ssub.s32 %s19, 1
        %s255 = sand.u32 %s44, 1
        %s256 = scalar_lea.sflag [#allocation3], %s255
        %s257 = sand.u32 %s44, 1
        %s258 = smul.addr %s257, 4
        %s259 = scalar_lea.vmem [#allocation2], %s258
        // Predicated region
        $region41: #{tpu_custom_call.1} parent=39 // pred_check
          %p260 = pneg %p57
        $region42: #{tpu_custom_call.1} parent=39 // pred_check_branch
          %262 = sbr.rel (%p260) target = $region44
        $region43: #{tpu_custom_call.1} parent=39 // pred_region
          %264 = dma.done %s256, 64
        $region44: #{tpu_custom_call.1} parent=39 // pred_fallthru
          _
        // Predicated region
        $region45: #{tpu_custom_call.1} parent=39 // pred_check
          %p265 = pneg %p78
        $region46: #{tpu_custom_call.1} parent=39 // pred_check_branch
          %267 = sbr.rel (%p265) target = $region48
        $region47: #{tpu_custom_call.1} parent=39 // pred_region
          %269 = dma.done [#allocation6], 4096
        $region48: #{tpu_custom_call.1} parent=39 // pred_fallthru
          _
        // Predicated region
        $region49: #{tpu_custom_call.1} parent=39 // pred_check
          %p270 = pneg %p99
        $region50: #{tpu_custom_call.1} parent=39 // pred_check_branch
          %272 = sbr.rel (%p270) target = $region52
        $region51: #{tpu_custom_call.1} parent=39 // pred_region
          %274 = dma.done [#allocation6], 64
        $region52: #{tpu_custom_call.1} parent=39 // pred_fallthru
          _
        // Predicated region
        $region53: #{tpu_custom_call.1} parent=39 // pred_check
          %p275 = pneg %p120
        $region54: #{tpu_custom_call.1} parent=39 // pred_check_branch
          %277 = sbr.rel (%p275) target = $region56
        $region55: #{tpu_custom_call.1} parent=39 // pred_region
          %279 = dma.done [#allocation9], 4096
        $region56: #{tpu_custom_call.1} parent=39 // pred_fallthru
          _
        %s280 = sand.u32 %s44, 1
        %s281 = scalar_lea.sflag [#allocation3], %s280
        %s282 = sand.u32 %s44, 1
        %s283 = smul.addr %s282, 4
        %s284 = scalar_lea.vmem [#allocation2], %s283
        %p285 = pneg %p57
        %p286 = pneg %p54
        %p287 = pneg %p78
        %p288 = pneg %p75
        %p289 = pneg %p99
        %p290 = pneg %p96
        %p291 = pneg %p120
        %p292 = pneg %p117
        %p293 = pneg %p141
        %p294 = pneg %p138
        %p295 = pneg %p167
        %p296 = pneg %p164
        %s297 = sand.u32 %s154, 1
        %s298 = scalar_lea.sflag [#allocation4], %s297
        %s299 = sand.u32 %s154, 1
        %s300 = smul.addr %s299, 8
        %s301 = scalar_lea.vmem [#allocation10], %s300
        %v302 = vld [vmem:[%s259] sm:$0xf]
        %v303 = vld [vmem:[#allocation5] sm:$0xff]
        %v304 = vld [vmem:[#allocation5 + $0x8] sm:$0xff]
        %v305 = vld [vmem:[#allocation5 + $0x10] sm:$0xff]
        %v306 = vld [vmem:[#allocation5 + $0x18] sm:$0xff]
        %v307 = vld [vmem:[#allocation5 + $0x20] sm:$0xff]
        %v308 = vld [vmem:[#allocation5 + $0x28] sm:$0xff]
        %v309 = vld [vmem:[#allocation5 + $0x30] sm:$0xff]
        %v310 = vld [vmem:[#allocation5 + $0x38] sm:$0xff]
        %v311 = vld [vmem:[#allocation5 + $0x40] sm:$0xff]
        %v312 = vld [vmem:[#allocation5 + $0x48] sm:$0xff]
        %v313 = vld [vmem:[#allocation5 + $0x50] sm:$0xff]
        %v314 = vld [vmem:[#allocation5 + $0x58] sm:$0xff]
        %v315 = vld [vmem:[#allocation5 + $0x60] sm:$0xff]
        %v316 = vld [vmem:[#allocation5 + $0x68] sm:$0xff]
        %v317 = vld [vmem:[#allocation5 + $0x70] sm:$0xff]
        %v318 = vld [vmem:[#allocation5 + $0x78] sm:$0xff]
        %v319 = vld [vmem:[#allocation5 + $0x80] sm:$0xff]
        %v320 = vld [vmem:[#allocation5 + $0x88] sm:$0xff]
        %v321 = vld [vmem:[#allocation5 + $0x90] sm:$0xff]
        %v322 = vld [vmem:[#allocation5 + $0x98] sm:$0xff]
        %v323 = vld [vmem:[#allocation5 + $0xa0] sm:$0xff]
        %v324 = vld [vmem:[#allocation5 + $0xa8] sm:$0xff]
        %v325 = vld [vmem:[#allocation5 + $0xb0] sm:$0xff]
        %v326 = vld [vmem:[#allocation5 + $0xb8] sm:$0xff]
        %v327 = vld [vmem:[#allocation5 + $0xc0] sm:$0xff]
        %v328 = vld [vmem:[#allocation5 + $0xc8] sm:$0xff]
        %v329 = vld [vmem:[#allocation5 + $0xd0] sm:$0xff]
        %v330 = vld [vmem:[#allocation5 + $0xd8] sm:$0xff]
        %v331 = vld [vmem:[#allocation5 + $0xe0] sm:$0xff]
        %v332 = vld [vmem:[#allocation5 + $0xe8] sm:$0xff]
        %v333 = vld [vmem:[#allocation5 + $0xf0] sm:$0xff]
        %v334 = vld [vmem:[#allocation5 + $0xf8] sm:$0xff]
        %v335 = vld [vmem:[#allocation7] sm:$0xf]
        %v337 = vperm.slane %v335, 0
        %v338 = vperm.slane %v335, 1
        %v339 = vperm.slane %v335, 2
        %v340 = vperm.slane %v335, 3
        %v377 = vunpack.c.l.b16 %v303
        %v378 = vunpack.c.h.b16 %v303
        %v379 = vunpack.c.l.b16 %v304
        %v380 = vunpack.c.h.b16 %v304
        %v381 = vunpack.c.l.b16 %v305
        %v382 = vunpack.c.h.b16 %v305
        %v383 = vunpack.c.l.b16 %v306
        %v384 = vunpack.c.h.b16 %v306
        %v385 = vunpack.c.l.b16 %v307
        %v386 = vunpack.c.h.b16 %v307
        %v387 = vunpack.c.l.b16 %v308
        %v388 = vunpack.c.h.b16 %v308
        %v389 = vunpack.c.l.b16 %v309
        %v390 = vunpack.c.h.b16 %v309
        %v391 = vunpack.c.l.b16 %v310
        %v392 = vunpack.c.h.b16 %v310
        %v393 = vunpack.c.l.b16 %v311
        %v394 = vunpack.c.h.b16 %v311
        %v395 = vunpack.c.l.b16 %v312
        %v396 = vunpack.c.h.b16 %v312
        %v397 = vunpack.c.l.b16 %v313
        %v398 = vunpack.c.h.b16 %v313
        %v399 = vunpack.c.l.b16 %v314
        %v400 = vunpack.c.h.b16 %v314
        %v401 = vunpack.c.l.b16 %v315
        %v402 = vunpack.c.h.b16 %v315
        %v403 = vunpack.c.l.b16 %v316
        %v404 = vunpack.c.h.b16 %v316
        %v405 = vunpack.c.l.b16 %v317
        %v406 = vunpack.c.h.b16 %v317
        %v407 = vunpack.c.l.b16 %v318
        %v408 = vunpack.c.h.b16 %v318
        %v409 = vunpack.c.l.b16 %v319
        %v410 = vunpack.c.h.b16 %v319
        %v411 = vunpack.c.l.b16 %v320
        %v412 = vunpack.c.h.b16 %v320
        %v413 = vunpack.c.l.b16 %v321
        %v414 = vunpack.c.h.b16 %v321
        %v415 = vunpack.c.l.b16 %v322
        %v416 = vunpack.c.h.b16 %v322
        %v417 = vunpack.c.l.b16 %v323
        %v418 = vunpack.c.h.b16 %v323
        %v419 = vunpack.c.l.b16 %v324
        %v420 = vunpack.c.h.b16 %v324
        %v421 = vunpack.c.l.b16 %v325
        %v422 = vunpack.c.h.b16 %v325
        %v423 = vunpack.c.l.b16 %v326
        %v424 = vunpack.c.h.b16 %v326
        %v425 = vunpack.c.l.b16 %v327
        %v426 = vunpack.c.h.b16 %v327
        %v427 = vunpack.c.l.b16 %v328
        %v428 = vunpack.c.h.b16 %v328
        %v429 = vunpack.c.l.b16 %v329
        %v430 = vunpack.c.h.b16 %v329
        %v431 = vunpack.c.l.b16 %v330
        %v432 = vunpack.c.h.b16 %v330
        %v433 = vunpack.c.l.b16 %v331
        %v434 = vunpack.c.h.b16 %v331
        %v435 = vunpack.c.l.b16 %v332
        %v436 = vunpack.c.h.b16 %v332
        %v437 = vunpack.c.l.b16 %v333
        %v438 = vunpack.c.h.b16 %v333
        %v439 = vunpack.c.l.b16 %v334
        %v440 = vunpack.c.h.b16 %v334
        %v441 = vpack.c.b16 %v381, %v377
        %v442 = vpack.c.b16 %v382, %v378
        %v443 = vpack.c.b16 %v383, %v379
        %v444 = vpack.c.b16 %v384, %v380
        %v445 = vpack.c.b16 %v389, %v385
        %v446 = vpack.c.b16 %v390, %v386
        %v447 = vpack.c.b16 %v391, %v387
        %v448 = vpack.c.b16 %v392, %v388
        %v449 = vpack.c.b16 %v397, %v393
        %v450 = vpack.c.b16 %v398, %v394
        %v451 = vpack.c.b16 %v399, %v395
        %v452 = vpack.c.b16 %v400, %v396
        %v453 = vpack.c.b16 %v405, %v401
        %v454 = vpack.c.b16 %v406, %v402
        %v455 = vpack.c.b16 %v407, %v403
        %v456 = vpack.c.b16 %v408, %v404
        %v457 = vpack.c.b16 %v413, %v409
        %v458 = vpack.c.b16 %v414, %v410
        %v459 = vpack.c.b16 %v415, %v411
        %v460 = vpack.c.b16 %v416, %v412
        %v461 = vpack.c.b16 %v421, %v417
        %v462 = vpack.c.b16 %v422, %v418
        %v463 = vpack.c.b16 %v423, %v419
        %v464 = vpack.c.b16 %v424, %v420
        %v465 = vpack.c.b16 %v429, %v425
        %v466 = vpack.c.b16 %v430, %v426
        %v467 = vpack.c.b16 %v431, %v427
        %v468 = vpack.c.b16 %v432, %v428
        %v469 = vpack.c.b16 %v437, %v433
        %v470 = vpack.c.b16 %v438, %v434
        %v471 = vpack.c.b16 %v439, %v435
        %v472 = vpack.c.b16 %v440, %v436
        %505 = vmatpush.bf16.msra.mxu0 %v469
        %506 = vmatpush.bf16.msra.mxu0 %v465
        %507 = vmatpush.bf16.msra.mxu0 %v461
        %508 = vmatpush.bf16.msra.mxu0 %v457
        %509 = vmatpush.bf16.msra.mxu0 %v453
        %510 = vmatpush.bf16.msra.mxu0 %v449
        %511 = vmatpush.bf16.msra.mxu0 %v445
        %512 = vmatpush.bf16.msra.mxu0 %v441
        %513 = vmatmul.bf16.gmra.mxu0 %v302
        %v514 = vpop.f32.mrf.mxu0
        %v515 = vadd.f32 %v337, %v514
        %v516 = vpop.f32.mrf.mxu0
        %517 = vdwg.mxu0
        %518 = vmatpush.bf16.msra.mxu0 %v470
        %519 = vmatpush.bf16.msra.mxu0 %v466
        %520 = vmatpush.bf16.msra.mxu0 %v462
        %521 = vmatpush.bf16.msra.mxu0 %v458
        %522 = vmatpush.bf16.msra.mxu0 %v454
        %523 = vmatpush.bf16.msra.mxu0 %v450
        %524 = vmatpush.bf16.msra.mxu0 %v446
        %525 = vmatpush.bf16.msra.mxu0 %v442
        %526 = vmatmul.bf16.gmra.mxu0 %v302
        %v527 = vpop.f32.mrf.mxu0
        %v528 = vadd.f32 %v338, %v527
        %v529 = vpop.f32.mrf.mxu0
        %530 = vdwg.mxu0
        %531 = vmatpush.bf16.msra.mxu0 %v471
        %532 = vmatpush.bf16.msra.mxu0 %v467
        %533 = vmatpush.bf16.msra.mxu0 %v463
        %534 = vmatpush.bf16.msra.mxu0 %v459
        %535 = vmatpush.bf16.msra.mxu0 %v455
        %536 = vmatpush.bf16.msra.mxu0 %v451
        %537 = vmatpush.bf16.msra.mxu0 %v447
        %538 = vmatpush.bf16.msra.mxu0 %v443
        %539 = vmatmul.bf16.gmra.mxu0 %v302
        %v540 = vpop.f32.mrf.mxu0
        %v541 = vadd.f32 %v339, %v540
        %v542 = vpop.f32.mrf.mxu0
        %543 = vdwg.mxu0
        %544 = vmatpush.bf16.msra.mxu0 %v472
        %545 = vmatpush.bf16.msra.mxu0 %v468
        %546 = vmatpush.bf16.msra.mxu0 %v464
        %547 = vmatpush.bf16.msra.mxu0 %v460
        %548 = vmatpush.bf16.msra.mxu0 %v456
        %549 = vmatpush.bf16.msra.mxu0 %v452
        %550 = vmatpush.bf16.msra.mxu0 %v448
        %551 = vmatpush.bf16.msra.mxu0 %v444
        %552 = vmatmul.bf16.gmra.mxu0 %v302
        %v553 = vpop.f32.mrf.mxu0
        %v554 = vadd.f32 %v340, %v553
        %v555 = vpop.f32.mrf.mxu0
        %556 = vdwg.mxu0
        %v557 = vmax.f32 %v515, 0.0
        %v558 = vmax.f32 %v528, 0.0
        %v559 = vmax.f32 %v541, 0.0
        %v560 = vmax.f32 %v554, 0.0
        %v561 = vpack.c.bf16 %v557, %v557
        %v562 = vpack.c.bf16 %v558, %v558
        %v563 = vpack.c.bf16 %v559, %v559
        %v564 = vpack.c.bf16 %v560, %v560
        %v565 = vld [vmem:[#allocation8] sm:$0xf]
        %v566 = vld [vmem:[#allocation8 + $0x4] sm:$0xf]
        %v567 = vld [vmem:[#allocation8 + $0x8] sm:$0xf]
        %v568 = vld [vmem:[#allocation8 + $0xc] sm:$0xf]
        %v569 = vld [vmem:[#allocation8 + $0x10] sm:$0xf]
        %v570 = vld [vmem:[#allocation8 + $0x14] sm:$0xf]
        %v571 = vld [vmem:[#allocation8 + $0x18] sm:$0xf]
        %v572 = vld [vmem:[#allocation8 + $0x1c] sm:$0xf]
        %v573 = vld [vmem:[#allocation8 + $0x20] sm:$0xf]
        %v574 = vld [vmem:[#allocation8 + $0x24] sm:$0xf]
        %v575 = vld [vmem:[#allocation8 + $0x28] sm:$0xf]
        %v576 = vld [vmem:[#allocation8 + $0x2c] sm:$0xf]
        %v577 = vld [vmem:[#allocation8 + $0x30] sm:$0xf]
        %v578 = vld [vmem:[#allocation8 + $0x34] sm:$0xf]
        %v579 = vld [vmem:[#allocation8 + $0x38] sm:$0xf]
        %v580 = vld [vmem:[#allocation8 + $0x3c] sm:$0xf]
        %v581 = vld [vmem:[#allocation8 + $0x40] sm:$0xf]
        %v582 = vld [vmem:[#allocation8 + $0x44] sm:$0xf]
        %v583 = vld [vmem:[#allocation8 + $0x48] sm:$0xf]
        %v584 = vld [vmem:[#allocation8 + $0x4c] sm:$0xf]
        %v585 = vld [vmem:[#allocation8 + $0x50] sm:$0xf]
        %v586 = vld [vmem:[#allocation8 + $0x54] sm:$0xf]
        %v587 = vld [vmem:[#allocation8 + $0x58] sm:$0xf]
        %v588 = vld [vmem:[#allocation8 + $0x5c] sm:$0xf]
        %v589 = vld [vmem:[#allocation8 + $0x60] sm:$0xf]
        %v590 = vld [vmem:[#allocation8 + $0x64] sm:$0xf]
        %v591 = vld [vmem:[#allocation8 + $0x68] sm:$0xf]
        %v592 = vld [vmem:[#allocation8 + $0x6c] sm:$0xf]
        %v593 = vld [vmem:[#allocation8 + $0x70] sm:$0xf]
        %v594 = vld [vmem:[#allocation8 + $0x74] sm:$0xf]
        %v595 = vld [vmem:[#allocation8 + $0x78] sm:$0xf]
        %v596 = vld [vmem:[#allocation8 + $0x7c] sm:$0xf]
        %v597 = vld [vmem:[#allocation8 + $0x80] sm:$0xf]
        %v598 = vld [vmem:[#allocation8 + $0x84] sm:$0xf]
        %v599 = vld [vmem:[#allocation8 + $0x88] sm:$0xf]
        %v600 = vld [vmem:[#allocation8 + $0x8c] sm:$0xf]
        %v601 = vld [vmem:[#allocation8 + $0x90] sm:$0xf]
        %v602 = vld [vmem:[#allocation8 + $0x94] sm:$0xf]
        %v603 = vld [vmem:[#allocation8 + $0x98] sm:$0xf]
        %v604 = vld [vmem:[#allocation8 + $0x9c] sm:$0xf]
        %v605 = vld [vmem:[#allocation8 + $0xa0] sm:$0xf]
        %v606 = vld [vmem:[#allocation8 + $0xa4] sm:$0xf]
        %v607 = vld [vmem:[#allocation8 + $0xa8] sm:$0xf]
        %v608 = vld [vmem:[#allocation8 + $0xac] sm:$0xf]
        %v609 = vld [vmem:[#allocation8 + $0xb0] sm:$0xf]
        %v610 = vld [vmem:[#allocation8 + $0xb4] sm:$0xf]
        %v611 = vld [vmem:[#allocation8 + $0xb8] sm:$0xf]
        %v612 = vld [vmem:[#allocation8 + $0xbc] sm:$0xf]
        %v613 = vld [vmem:[#allocation8 + $0xc0] sm:$0xf]
        %v614 = vld [vmem:[#allocation8 + $0xc4] sm:$0xf]
        %v615 = vld [vmem:[#allocation8 + $0xc8] sm:$0xf]
        %v616 = vld [vmem:[#allocation8 + $0xcc] sm:$0xf]
        %v617 = vld [vmem:[#allocation8 + $0xd0] sm:$0xf]
        %v618 = vld [vmem:[#allocation8 + $0xd4] sm:$0xf]
        %v619 = vld [vmem:[#allocation8 + $0xd8] sm:$0xf]
        %v620 = vld [vmem:[#allocation8 + $0xdc] sm:$0xf]
        %v621 = vld [vmem:[#allocation8 + $0xe0] sm:$0xf]
        %v622 = vld [vmem:[#allocation8 + $0xe4] sm:$0xf]
        %v623 = vld [vmem:[#allocation8 + $0xe8] sm:$0xf]
        %v624 = vld [vmem:[#allocation8 + $0xec] sm:$0xf]
        %v625 = vld [vmem:[#allocation8 + $0xf0] sm:$0xf]
        %v626 = vld [vmem:[#allocation8 + $0xf4] sm:$0xf]
        %v627 = vld [vmem:[#allocation8 + $0xf8] sm:$0xf]
        %v628 = vld [vmem:[#allocation8 + $0xfc] sm:$0xf]
        %v629 = vld [vmem:[%s4] sm:$0x1]
        %v631 = vperm.slane %v629, 0
        %v697 = vunpack.c.l.b16 %v565
        %v698 = vunpack.c.l.b16 %v566
        %v699 = vunpack.c.l.b16 %v567
        %v700 = vunpack.c.l.b16 %v568
        %v701 = vunpack.c.l.b16 %v569
        %v702 = vunpack.c.l.b16 %v570
        %v703 = vunpack.c.l.b16 %v571
        %v704 = vunpack.c.l.b16 %v572
        %v705 = vunpack.c.l.b16 %v573
        %v706 = vunpack.c.l.b16 %v574
        %v707 = vunpack.c.l.b16 %v575
        %v708 = vunpack.c.l.b16 %v576
        %v709 = vunpack.c.l.b16 %v577
        %v710 = vunpack.c.l.b16 %v578
        %v711 = vunpack.c.l.b16 %v579
        %v712 = vunpack.c.l.b16 %v580
        %v713 = vunpack.c.l.b16 %v581
        %v714 = vunpack.c.l.b16 %v582
        %v715 = vunpack.c.l.b16 %v583
        %v716 = vunpack.c.l.b16 %v584
        %v717 = vunpack.c.l.b16 %v585
        %v718 = vunpack.c.l.b16 %v586
        %v719 = vunpack.c.l.b16 %v587
        %v720 = vunpack.c.l.b16 %v588
        %v721 = vunpack.c.l.b16 %v589
        %v722 = vunpack.c.l.b16 %v590
        %v723 = vunpack.c.l.b16 %v591
        %v724 = vunpack.c.l.b16 %v592
        %v725 = vunpack.c.l.b16 %v593
        %v726 = vunpack.c.l.b16 %v594
        %v727 = vunpack.c.l.b16 %v595
        %v728 = vunpack.c.l.b16 %v596
        %v729 = vunpack.c.l.b16 %v597
        %v730 = vunpack.c.l.b16 %v598
        %v731 = vunpack.c.l.b16 %v599
        %v732 = vunpack.c.l.b16 %v600
        %v733 = vunpack.c.l.b16 %v601
        %v734 = vunpack.c.l.b16 %v602
        %v735 = vunpack.c.l.b16 %v603
        %v736 = vunpack.c.l.b16 %v604
        %v737 = vunpack.c.l.b16 %v605
        %v738 = vunpack.c.l.b16 %v606
        %v739 = vunpack.c.l.b16 %v607
        %v740 = vunpack.c.l.b16 %v608
        %v741 = vunpack.c.l.b16 %v609
        %v742 = vunpack.c.l.b16 %v610
        %v743 = vunpack.c.l.b16 %v611
        %v744 = vunpack.c.l.b16 %v612
        %v745 = vunpack.c.l.b16 %v613
        %v746 = vunpack.c.l.b16 %v614
        %v747 = vunpack.c.l.b16 %v615
        %v748 = vunpack.c.l.b16 %v616
        %v749 = vunpack.c.l.b16 %v617
        %v750 = vunpack.c.l.b16 %v618
        %v751 = vunpack.c.l.b16 %v619
        %v752 = vunpack.c.l.b16 %v620
        %v753 = vunpack.c.l.b16 %v621
        %v754 = vunpack.c.l.b16 %v622
        %v755 = vunpack.c.l.b16 %v623
        %v756 = vunpack.c.l.b16 %v624
        %v757 = vunpack.c.l.b16 %v625
        %v758 = vunpack.c.l.b16 %v626
        %v759 = vunpack.c.l.b16 %v627
        %v760 = vunpack.c.l.b16 %v628
        %v761 = vpack.c.b16 %v698, %v697
        %v762 = vpack.c.b16 %v700, %v699
        %v763 = vpack.c.b16 %v702, %v701
        %v764 = vpack.c.b16 %v704, %v703
        %v765 = vpack.c.b16 %v706, %v705
        %v766 = vpack.c.b16 %v708, %v707
        %v767 = vpack.c.b16 %v710, %v709
        %v768 = vpack.c.b16 %v712, %v711
        %v769 = vpack.c.b16 %v714, %v713
        %v770 = vpack.c.b16 %v716, %v715
        %v771 = vpack.c.b16 %v718, %v717
        %v772 = vpack.c.b16 %v720, %v719
        %v773 = vpack.c.b16 %v722, %v721
        %v774 = vpack.c.b16 %v724, %v723
        %v775 = vpack.c.b16 %v726, %v725
        %v776 = vpack.c.b16 %v728, %v727
        %v777 = vpack.c.b16 %v730, %v729
        %v778 = vpack.c.b16 %v732, %v731
        %v779 = vpack.c.b16 %v734, %v733
        %v780 = vpack.c.b16 %v736, %v735
        %v781 = vpack.c.b16 %v738, %v737
        %v782 = vpack.c.b16 %v740, %v739
        %v783 = vpack.c.b16 %v742, %v741
        %v784 = vpack.c.b16 %v744, %v743
        %v785 = vpack.c.b16 %v746, %v745
        %v786 = vpack.c.b16 %v748, %v747
        %v787 = vpack.c.b16 %v750, %v749
        %v788 = vpack.c.b16 %v752, %v751
        %v789 = vpack.c.b16 %v754, %v753
        %v790 = vpack.c.b16 %v756, %v755
        %v791 = vpack.c.b16 %v758, %v757
        %v792 = vpack.c.b16 %v760, %v759
        %825 = vmatpush.bf16.msra.mxu0 %v768
        %826 = vmatpush.bf16.msra.mxu0 %v767
        %827 = vmatpush.bf16.msra.mxu0 %v766
        %828 = vmatpush.bf16.msra.mxu0 %v765
        %829 = vmatpush.bf16.msra.mxu0 %v764
        %830 = vmatpush.bf16.msra.mxu0 %v763
        %831 = vmatpush.bf16.msra.mxu0 %v762
        %832 = vmatpush.bf16.msra.mxu0 %v761
        %833 = vmatmul.bf16.gmra.mxu0 %v561
        %v834 = vpop.f32.mrf.mxu0
        %v835 = vadd.f32 %v631, %v834
        %v836 = vpop.f32.mrf.mxu0
        %837 = vdwg.mxu0
        %838 = vmatpush.bf16.msra.mxu0 %v776
        %839 = vmatpush.bf16.msra.mxu0 %v775
        %840 = vmatpush.bf16.msra.mxu0 %v774
        %841 = vmatpush.bf16.msra.mxu0 %v773
        %842 = vmatpush.bf16.msra.mxu0 %v772
        %843 = vmatpush.bf16.msra.mxu0 %v771
        %844 = vmatpush.bf16.msra.mxu0 %v770
        %845 = vmatpush.bf16.msra.mxu0 %v769
        %846 = vmatmul.bf16.gmra.mxu0 %v562
        %v847 = vpop.f32.mrf.mxu0
        %v848 = vadd.f32 %v835, %v847
        %v849 = vpop.f32.mrf.mxu0
        %850 = vdwg.mxu0
        %851 = vmatpush.bf16.msra.mxu0 %v784
        %852 = vmatpush.bf16.msra.mxu0 %v783
        %853 = vmatpush.bf16.msra.mxu0 %v782
        %854 = vmatpush.bf16.msra.mxu0 %v781
        %855 = vmatpush.bf16.msra.mxu0 %v780
        %856 = vmatpush.bf16.msra.mxu0 %v779
        %857 = vmatpush.bf16.msra.mxu0 %v778
        %858 = vmatpush.bf16.msra.mxu0 %v777
        %859 = vmatmul.bf16.gmra.mxu0 %v563
        %v860 = vpop.f32.mrf.mxu0
        %v861 = vadd.f32 %v848, %v860
        %v862 = vpop.f32.mrf.mxu0
        %863 = vdwg.mxu0
        %864 = vmatpush.bf16.msra.mxu0 %v792
        %865 = vmatpush.bf16.msra.mxu0 %v791
        %866 = vmatpush.bf16.msra.mxu0 %v790
        %867 = vmatpush.bf16.msra.mxu0 %v789
        %868 = vmatpush.bf16.msra.mxu0 %v788
        %869 = vmatpush.bf16.msra.mxu0 %v787
        %870 = vmatpush.bf16.msra.mxu0 %v786
        %871 = vmatpush.bf16.msra.mxu0 %v785
        %872 = vmatmul.bf16.gmra.mxu0 %v564
        %v873 = vpop.f32.mrf.mxu0
        %v874 = vadd.f32 %v861, %v873
        %v875 = vpop.f32.mrf.mxu0
        %876 = vdwg.mxu0
        %877 = vst [vmem:[%s301] sm:$0xff] %v874
        %s878 = sand.u32 %s154, 1
        %s879 = scalar_lea.sflag [#allocation4], %s878
        %s880 = sand.u32 %s154, 1
        %s881 = smul.addr %s880, 8
        %s882 = scalar_lea.vmem [#allocation10], %s881
        // Predicated region
        $region57: #{tpu_custom_call.1} parent=39 // pred_check
          %p883 = pneg %p164
        $region58: #{tpu_custom_call.1} parent=39 // pred_check_branch
          %885 = sbr.rel (%p883) target = $region60
        $region59: #{tpu_custom_call.1} parent=39 // pred_region
          %887 = vsyncadd %s879, 0
          %s888 = smul.addr %s28, 8
          %s889 = scalar_lea.hbm %s5, %s888
          %s891 = sshll.u32 %s882, 4
          %s892 = int_to_ptr.vmem [resolvable:$true] %s891
          %s893 = sshll.u32 %s889, 4
          %s894 = int_to_ptr.hbm [resolvable:$true] %s893
          %896 = dma.vmem_to_hbm [thread:$0]  %s892, 128, %s894, %s879
        $region60: #{tpu_custom_call.1} parent=39 // pred_fallthru
          _
      $region40: #{tpu_custom_call.1} parent=5 // pred_fallthru
        _
      %p897 = scmp.le.s32.totalorder 2, %s19
      // Predicated region
      $region61: #{tpu_custom_call.1} parent=5 // pred_check
        %p898 = pneg %p897
      $region62: #{tpu_custom_call.1} parent=5 // pred_check_branch
        %900 = sbr.rel (%p898) target = $region64
      $region63: #{tpu_custom_call.1} parent=5 // pred_region
        %s901 = ssub.s32 %s19, 2
        // Predicated region
        $region65: #{tpu_custom_call.1} parent=63 // pred_check
          %p902 = pneg %p170
        $region66: #{tpu_custom_call.1} parent=63 // pred_check_branch
          %904 = sbr.rel (%p902) target = $region68
        $region67: #{tpu_custom_call.1} parent=63 // pred_region
          %s905 = sand.u32 %s155, 1
          %s906 = scalar_lea.sflag [#allocation4], %s905
          %s907 = sand.u32 %s155, 1
          %s908 = smul.addr %s907, 8
          %s909 = scalar_lea.vmem [#allocation10], %s908
          %911 = dma.done %s906, 128
        $region68: #{tpu_custom_call.1} parent=63 // pred_fallthru
          _
      $region64: #{tpu_custom_call.1} parent=5 // pred_fallthru
        _
    $region6: #{tpu_custom_call.1} parent=1 // loop_footer
      %s23 = sadd.s32 1, %s19
    $region7: #{tpu_custom_call.1} parent=1 // loop_footer_branch
      %18 = sbr.rel target = $region3
    $region8: #{tpu_custom_call.1} parent=1 // loop_exit
      _
    %912 = vsyncpa [#allocation3], 1
    %s913 = scalar_lea.sflag [#allocation3], 1
    %914 = vsyncpa %s913, 1
    %915 = vsyncpa [#allocation6], 1
    %916 = vsyncpa [#allocation9], 1
    %917 = vsyncpa [#allocation4], 1
    %s918 = scalar_lea.sflag [#allocation4], 1
    %919 = vsyncpa %s918, 1

</llo_original>
